<compile_context>
chip_gen: v7x
topology: tpu7x:2x2x1
jax: 0.10.0
libtpu: 0.0.40
codegen_flags: <defaults>
</compile_context>

<pallas_src>
import math
import functools

import jax
import jax.numpy as jnp
from jax.experimental import pallas as pl
from jax.experimental.pallas import tpu as pltpu

# ---- problem sizes (small, consistent with the module's __init__) ----------
B = 8         # batch size
D = 32        # observation dim (vector encoder input)
H = 64        # encoder hidden size
F = 64        # encoder.get_feature_size()
NQ = 16       # n_quantiles
A = 4         # action_size
OUT_PAD = 128 # lane-dense padded output width (sliced to A in the wrapper)


def _qr_forward_kernel(x_ref, w1_ref, b1_ref, w2_ref, b2_ref,
                       wf_ref, bf_ref, out_ref):
    # ---------------- encoder (2-layer ReLU MLP) ----------------
    x = x_ref[...]                                                    # [B, D]
    h = jnp.dot(x, w1_ref[...], preferred_element_type=jnp.float32) + b1_ref[...]
    h = jnp.maximum(h, 0.0)                                           # [B, H]
    h = jnp.dot(h, w2_ref[...], preferred_element_type=jnp.float32) + b2_ref[...]
    h = jnp.maximum(h, 0.0)                                           # [B, F]

    # ---------------- fc head with the quantile mean pre-folded -----------
    # wf_ref is [F, OUT_PAD] (columns 0..A-1 hold the per-action mean over
    # the NQ fc columns; the rest are zero padding for a lane-dense store).
    out_ref[...] = (jnp.dot(h, wf_ref[...], preferred_element_type=jnp.float32)
                    + bf_ref[...])                                    # [B, OUT_PAD]


@jax.jit
def qr_forward(x, params):
    w1, b1, w2, b2, wf, bf = params

    # Fold the mean over quantiles into the fc weights (exact: the mean is
    # applied after a linear map).  fc output layout is [A*NQ] with the NQ
    # quantiles of action `a` occupying columns a*NQ .. (a+1)*NQ-1, matching
    # `.view(-1, action_size, n_quantiles)` in the PyTorch module.
    wf_fold = wf.reshape(F, A, NQ).mean(axis=2)                       # [F, A]
    bf_fold = bf.reshape(1, A, NQ).mean(axis=2)                       # [1, A]

    # Pad to a lane-dense 128-wide output tile (unmasked vst in the kernel).
    wf_pad = jnp.zeros((F, OUT_PAD), jnp.float32).at[:, :A].set(wf_fold)
    bf_pad = jnp.zeros((1, OUT_PAD), jnp.float32).at[:, :A].set(bf_fold)

    full = lambda a: pl.BlockSpec(a.shape, lambda: (0,) * a.ndim)
    out_padded = pl.pallas_call(
        _qr_forward_kernel,
        out_shape=jax.ShapeDtypeStruct((B, OUT_PAD), jnp.float32),
        in_specs=[full(x), full(w1), full(b1), full(w2), full(b2),
                  full(wf_pad), full(bf_pad)],
        out_specs=pl.BlockSpec((B, OUT_PAD), lambda: (0, 0)),
    )(x, w1, b1, w2, b2, wf_pad, bf_pad)
    return out_padded[:, :A]                                          # [B, A]


def reference_forward(x, params):
    """Plain-JAX transcription of DiscreteQRQFunction.forward (no folding)."""
    w1, b1, w2, b2, wf, bf = params
    h = jax.nn.relu(x @ w1 + b1)
    h = jax.nn.relu(h @ w2 + b2)                                      # [B, F]
    # taus = _make_taus(h) is computed in the module but does not affect the
    # forward() output, so it is omitted here.
    q = h @ wf + bf                                                   # [B, A*NQ]
    quantiles = q.reshape(B, A, NQ)                                   # [B, A, NQ]
    return quantiles.mean(axis=2)                                     # [B, A]


def make_params(key):
    """Deterministic parameter init.  Weights stored as [in, out]."""
    ks = jax.random.split(key, 6)

    def lin(kw, kb, fan_in, fan_out):
        bound = 1.0 / math.sqrt(fan_in)
        w = jax.random.uniform(kw, (fan_in, fan_out), jnp.float32, -bound, bound)
        b = jax.random.uniform(kb, (1, fan_out), jnp.float32, -bound, bound)
        return w, b

    w1, b1 = lin(ks[0], ks[1], D, H)          # encoder layer 1
    w2, b2 = lin(ks[2], ks[3], H, F)          # encoder layer 2
    wf, bf = lin(ks[4], ks[5], F, A * NQ)     # self._fc : Linear(F, A*NQ)
    return (w1, b1, w2, b2, wf, bf)


if __name__ == "__main__":
    key = jax.random.PRNGKey(0)
    k_x, k_p = jax.random.split(key)
    x = jax.random.normal(k_x, (B, D), dtype=jnp.float32)
    params = make_params(k_p)

    out = qr_forward(x, params)
    out = jax.block_until_ready(out)

    ref = reference_forward(x, params)
    assert out.shape == (B, A), out.shape
    assert jnp.allclose(out, ref, atol=1e-4, rtol=1e-4), (out, ref)

    print("KERNEL_OK")
</pallas_src>

<mosaic_0001>
module attributes {stable_mosaic.version = 11 : i64} {
  func.func @_qr_forward_kernel(%arg0: memref<8x32xf32, #tpu.memory_space<vmem>>, %arg1: memref<32x64xf32, #tpu.memory_space<vmem>>, %arg2: memref<1x64xf32, #tpu.memory_space<vmem>>, %arg3: memref<64x64xf32, #tpu.memory_space<vmem>>, %arg4: memref<1x64xf32, #tpu.memory_space<vmem>>, %arg5: memref<64x128xf32, #tpu.memory_space<vmem>>, %arg6: memref<1x128xf32, #tpu.memory_space<vmem>>, %arg7: memref<8x128xf32, #tpu.memory_space<vmem>>) attributes {dimension_semantics = [], scalar_prefetch = 0 : i64, scratch_operands = 0 : i64, tpu.core_type = #tpu.core_type<tc>} {
    %c0 = arith.constant 0 : index
    %c0_0 = arith.constant 0 : index
    %0 = vector.load %arg0[%c0, %c0_0] : memref<8x32xf32, #tpu.memory_space<vmem>>, vector<8x32xf32>
    %c0_1 = arith.constant 0 : index
    %c0_2 = arith.constant 0 : index
    %1 = vector.load %arg1[%c0_1, %c0_2] : memref<32x64xf32, #tpu.memory_space<vmem>>, vector<32x64xf32>
    %cst = arith.constant dense<0.000000e+00> : vector<8x64xf32>
    %2 = tpu.matmul %0, %1, %cst {dimension_numbers = #tpu.dot_dimension_numbers<[1], [0], [0], [1], [0, 0, 1, 1], [], []>} : vector<8x32xf32>, vector<32x64xf32>, vector<8x64xf32> -> vector<8x64xf32>
    %c0_3 = arith.constant 0 : index
    %c0_4 = arith.constant 0 : index
    %3 = vector.load %arg2[%c0_3, %c0_4] : memref<1x64xf32, #tpu.memory_space<vmem>>, vector<1x64xf32>
    %4 = vector.broadcast %3 : vector<1x64xf32> to vector<8x64xf32>
    %5 = arith.addf %2, %4 : vector<8x64xf32>
    %cst_5 = arith.constant 0.000000e+00 : f32
    %6 = vector.broadcast %cst_5 : f32 to vector<8x64xf32>
    %7 = arith.maximumf %5, %6 : vector<8x64xf32>
    %c0_6 = arith.constant 0 : index
    %c0_7 = arith.constant 0 : index
    %8 = vector.load %arg3[%c0_6, %c0_7] : memref<64x64xf32, #tpu.memory_space<vmem>>, vector<64x64xf32>
    %cst_8 = arith.constant dense<0.000000e+00> : vector<8x64xf32>
    %9 = tpu.matmul %7, %8, %cst_8 {dimension_numbers = #tpu.dot_dimension_numbers<[1], [0], [0], [1], [0, 0, 1, 1], [], []>} : vector<8x64xf32>, vector<64x64xf32>, vector<8x64xf32> -> vector<8x64xf32>
    %c0_9 = arith.constant 0 : index
    %c0_10 = arith.constant 0 : index
    %10 = vector.load %arg4[%c0_9, %c0_10] : memref<1x64xf32, #tpu.memory_space<vmem>>, vector<1x64xf32>
    %11 = vector.broadcast %10 : vector<1x64xf32> to vector<8x64xf32>
    %12 = arith.addf %9, %11 : vector<8x64xf32>
    %cst_11 = arith.constant 0.000000e+00 : f32
    %13 = vector.broadcast %cst_11 : f32 to vector<8x64xf32>
    %14 = arith.maximumf %12, %13 : vector<8x64xf32>
    %c0_12 = arith.constant 0 : index
    %c0_13 = arith.constant 0 : index
    %15 = vector.load %arg5[%c0_12, %c0_13] : memref<64x128xf32, #tpu.memory_space<vmem>>, vector<64x128xf32>
    %cst_14 = arith.constant dense<0.000000e+00> : vector<8x128xf32>
    %16 = tpu.matmul %14, %15, %cst_14 {dimension_numbers = #tpu.dot_dimension_numbers<[1], [0], [0], [1], [0, 0, 1, 1], [], []>} : vector<8x64xf32>, vector<64x128xf32>, vector<8x128xf32> -> vector<8x128xf32>
    %c0_15 = arith.constant 0 : index
    %c0_16 = arith.constant 0 : index
    %17 = vector.load %arg6[%c0_15, %c0_16] : memref<1x128xf32, #tpu.memory_space<vmem>>, vector<1x128xf32>
    %18 = vector.broadcast %17 : vector<1x128xf32> to vector<8x128xf32>
    %19 = arith.addf %16, %18 : vector<8x128xf32>
    %c0_17 = arith.constant 0 : index
    %c0_18 = arith.constant 0 : index
    %20 = vector.load %arg7[%c0_17, %c0_18] : memref<8x128xf32, #tpu.memory_space<vmem>>, vector<8x128xf32>
    tpu.vector_store %arg7[%c0_17, %c0_18], %19 {strides = array<i32>} : memref<8x128xf32, #tpu.memory_space<vmem>>, vector<8x128xf32>,
    return
  }
}

</mosaic_0001>

<llo_original>
// kernel: qr_forward.1
$region0: #{qr_forward.1}
  #allocation0 [shape = 'u32[]', space=smem, size = 0x4, offset = 0x4, fixed_abs, tag = 'smem constant byte address 0x4 - core index']
  #allocation1 [shape = 'u32[144,128]{1,0:T(1,128)}', space=vmem, size = 0x12000, scoped, tag = 'internal scratch']
  %s0 = inlined_call_operand.vmem [shape: f32[8,32], index: 0, kind: input, shape index: {}]
  %s1 = inlined_call_operand.vmem [shape: f32[32,64], index: 1, kind: input, shape index: {}]
  %s2 = inlined_call_operand.vmem [shape: f32[1,64], index: 2, kind: input, shape index: {}]
  %s3 = inlined_call_operand.vmem [shape: f32[64,64], index: 3, kind: input, shape index: {}]
  %s4 = inlined_call_operand.vmem [shape: f32[1,64], index: 4, kind: input, shape index: {}]
  %s5 = inlined_call_operand.vmem [shape: f32[64,128], index: 5, kind: input, shape index: {}]
  %s6 = inlined_call_operand.vmem [shape: f32[1,128], index: 6, kind: input, shape index: {}]
  %s7 = inlined_call_operand.vmem [shape: f32[8,128], index: 7, kind: output, shape index: {}]
  %s8 = sld [smem:[#allocation0]]
  $region38: #{qr_forward.1} parent=0
    _
  %s10 = ssub.s32 1, %s8
  %s11 = scalar_select 0, %s10, %s8
  // Predicated region
  $region2: #{qr_forward.1} parent=0 // pred_check
    _
  $region3: #{qr_forward.1} parent=0 // pred_check_branch
    %13 = sbr.rel (0) target = $region5
  $region4: #{qr_forward.1} parent=0 // pred_region
    _
  $region5: #{qr_forward.1} parent=0 // pred_fallthru
    _
  // Predicated region
  $region6: #{qr_forward.1} parent=0 // pred_check
    _
  $region7: #{qr_forward.1} parent=0 // pred_check_branch
    %15 = sbr.rel (0) target = $region9
  $region8: #{qr_forward.1} parent=0 // pred_region
    _
  $region9: #{qr_forward.1} parent=0 // pred_fallthru
    _
  // Predicated region
  $region10: #{qr_forward.1} parent=0 // pred_check
    _
  $region11: #{qr_forward.1} parent=0 // pred_check_branch
    %17 = sbr.rel (0) target = $region13
  $region12: #{qr_forward.1} parent=0 // pred_region
    _
  $region13: #{qr_forward.1} parent=0 // pred_fallthru
    _
  // Predicated region
  $region14: #{qr_forward.1} parent=0 // pred_check
    _
  $region15: #{qr_forward.1} parent=0 // pred_check_branch
    %19 = sbr.rel (0) target = $region17
  $region16: #{qr_forward.1} parent=0 // pred_region
    _
  $region17: #{qr_forward.1} parent=0 // pred_fallthru
    _
  // Predicated region
  $region18: #{qr_forward.1} parent=0 // pred_check
    _
  $region19: #{qr_forward.1} parent=0 // pred_check_branch
    %21 = sbr.rel (0) target = $region21
  $region20: #{qr_forward.1} parent=0 // pred_region
    _
  $region21: #{qr_forward.1} parent=0 // pred_fallthru
    _
  // Predicated region
  $region22: #{qr_forward.1} parent=0 // pred_check
    _
  $region23: #{qr_forward.1} parent=0 // pred_check_branch
    %23 = sbr.rel (0) target = $region25
  $region24: #{qr_forward.1} parent=0 // pred_region
    _
  $region25: #{qr_forward.1} parent=0 // pred_fallthru
    _
  // Predicated region
  $region26: #{qr_forward.1} parent=0 // pred_check
    _
  $region27: #{qr_forward.1} parent=0 // pred_check_branch
    %25 = sbr.rel (0) target = $region29
  $region28: #{qr_forward.1} parent=0 // pred_region
    _
  $region29: #{qr_forward.1} parent=0 // pred_fallthru
    _
  %v26 = vld [vmem:[%s0] sm:$0xff]
  %v27 = vld [vmem:[%s1] sm:$0xff]
  %v28 = vld [vmem:[%s1 + $0x8] sm:$0xff]
  %v29 = vld [vmem:[%s1 + $0x10] sm:$0xff]
  %v30 = vld [vmem:[%s1 + $0x18] sm:$0xff]
  %v31 = vld [vmem:[%s2] sm:$0x1]
  %v33 = vlaneseq
  %v34 = vshrl.u32 %v33, 7
  %v35 = vsub.s32 0, %v34
  %v36 = vrot.slane %v31, %v35
  %vm38 = vcmask 261120
  %v40 = vsel %vm38, %v26, 0
  %42 = vmatprep.subr.mxu0 0.0
  %43 = vmatpush1.msra.mxu0 %v27
  %44 = vmatprep.subr.mxu0 0.0
  %45 = vmatpush1.msra.mxu0 %v28
  %46 = vmatprep.subr.mxu0 0.0
  %47 = vmatpush1.msra.mxu0 %v29
  %48 = vmatprep.subr.mxu0 0.0
  %49 = vmatpush1.msra.mxu0 %v30
  %50 = vmatprep.subr.mxu0 0.0
  %51 = vmatpush1.msra.mxu0 0.0
  %52 = vmatprep.subr.mxu0 0.0
  %53 = vmatpush1.msra.mxu0 0.0
  %54 = vmatprep.subr.mxu0 0.0
  %55 = vmatpush1.msra.mxu0 0.0
  %56 = vmatprep.subr.mxu0 0.0
  %57 = vmatpush1.msra.mxu0 0.0
  %58 = vmatprep.subr.mxu0 0.0
  %59 = vmatpush1.msra.mxu0 0.0
  %60 = vmatprep.subr.mxu0 0.0
  %61 = vmatpush1.msra.mxu0 0.0
  %62 = vmatprep.subr.mxu0 0.0
  %63 = vmatpush1.msra.mxu0 0.0
  %64 = vmatprep.subr.mxu0 0.0
  %65 = vmatpush1.msra.mxu0 0.0
  %66 = vmatprep.subr.mxu0 0.0
  %67 = vmatpush1.msra.mxu0 0.0
  %68 = vmatprep.subr.mxu0 0.0
  %69 = vmatpush1.msra.mxu0 0.0
  %70 = vmatprep.subr.mxu0 0.0
  %71 = vmatpush1.msra.mxu0 0.0
  %72 = vmatprep.subr.mxu0 0.0
  %73 = vmatpush1.msra.mxu0 0.0
  %74 = vmatprep.subr.mxu0 0.0
  %75 = vmatpush1.msra.mxu0 0.0
  %76 = vmatprep.subr.mxu0 0.0
  %77 = vmatpush1.msra.mxu0 0.0
  %78 = vmatprep.subr.mxu0 0.0
  %79 = vmatpush1.msra.mxu0 0.0
  %80 = vmatprep.subr.mxu0 0.0
  %81 = vmatpush1.msra.mxu0 0.0
  %82 = vmatprep.subr.mxu0 0.0
  %83 = vmatpush1.msra.mxu0 0.0
  %84 = vmatprep.subr.mxu0 0.0
  %85 = vmatpush1.msra.mxu0 0.0
  %86 = vmatprep.subr.mxu0 0.0
  %87 = vmatpush1.msra.mxu0 0.0
  %88 = vmatprep.subr.mxu0 0.0
  %89 = vmatpush1.msra.mxu0 0.0
  %90 = vmatprep.subr.mxu0 0.0
  %91 = vmatpush1.msra.mxu0 0.0
  %92 = vmatprep.subr.mxu0 0.0
  %93 = vmatpush1.msra.mxu0 0.0
  %94 = vmatprep.subr.mxu0 0.0
  %95 = vmatpush1.msra.mxu0 0.0
  %96 = vmatprep.subr.mxu0 0.0
  %97 = vmatpush1.msra.mxu0 0.0
  %98 = vmatprep.subr.mxu0 0.0
  %99 = vmatpush1.msra.mxu0 0.0
  %100 = vmatprep.subr.mxu0 0.0
  %101 = vmatpush1.msra.mxu0 0.0
  %102 = vmatprep.subr.mxu0 0.0
  %103 = vmatpush1.msra.mxu0 0.0
  %104 = vmatprep.subr.mxu0 0.0
  %105 = vmatpush1.msra.mxu0 0.0
  %106 = vmatprep.mubr.f32.mxu0 0.0
  %107 = vmatmul.mubr.f32.gmra.mrb[0].mxu0 %v40
  %v108 = vpop.f32.mrb[0].mxu0
  %v109 = vadd.f32 %v36, %v108
  %v110 = vpop.f32.mrb[0].mxu0
  %111 = vdwg.mxu0
  %v112 = vmax.f32 %v109, 0.0
  %v113 = vld [vmem:[%s3] sm:$0xff]
  %v114 = vld [vmem:[%s3 + $0x8] sm:$0xff]
  %v115 = vld [vmem:[%s3 + $0x10] sm:$0xff]
  %v116 = vld [vmem:[%s3 + $0x18] sm:$0xff]
  %v117 = vld [vmem:[%s3 + $0x20] sm:$0xff]
  %v118 = vld [vmem:[%s3 + $0x28] sm:$0xff]
  %v119 = vld [vmem:[%s3 + $0x30] sm:$0xff]
  %v120 = vld [vmem:[%s3 + $0x38] sm:$0xff]
  %v121 = vld [vmem:[%s4] sm:$0x1]
  %v123 = vlaneseq
  %v124 = vshrl.u32 %v123, 7
  %v125 = vsub.s32 0, %v124
  %v126 = vrot.slane %v121, %v125
  %vm128 = vcmask 523264
  %v130 = vsel %vm128, %v112, 0
  %132 = vmatprep.subr.mxu0 0.0
  %133 = vmatpush1.msra.mxu0 %v113
  %134 = vmatprep.subr.mxu0 0.0
  %135 = vmatpush1.msra.mxu0 %v114
  %136 = vmatprep.subr.mxu0 0.0
  %137 = vmatpush1.msra.mxu0 %v115
  %138 = vmatprep.subr.mxu0 0.0
  %139 = vmatpush1.msra.mxu0 %v116
  %140 = vmatprep.subr.mxu0 0.0
  %141 = vmatpush1.msra.mxu0 %v117
  %142 = vmatprep.subr.mxu0 0.0
  %143 = vmatpush1.msra.mxu0 %v118
  %144 = vmatprep.subr.mxu0 0.0
  %145 = vmatpush1.msra.mxu0 %v119
  %146 = vmatprep.subr.mxu0 0.0
  %147 = vmatpush1.msra.mxu0 %v120
  %148 = vmatprep.subr.mxu0 0.0
  %149 = vmatpush1.msra.mxu0 0.0
  %150 = vmatprep.subr.mxu0 0.0
  %151 = vmatpush1.msra.mxu0 0.0
  %152 = vmatprep.subr.mxu0 0.0
  %153 = vmatpush1.msra.mxu0 0.0
  %154 = vmatprep.subr.mxu0 0.0
  %155 = vmatpush1.msra.mxu0 0.0
  %156 = vmatprep.subr.mxu0 0.0
  %157 = vmatpush1.msra.mxu0 0.0
  %158 = vmatprep.subr.mxu0 0.0
  %159 = vmatpush1.msra.mxu0 0.0
  %160 = vmatprep.subr.mxu0 0.0
  %161 = vmatpush1.msra.mxu0 0.0
  %162 = vmatprep.subr.mxu0 0.0
  %163 = vmatpush1.msra.mxu0 0.0
  %164 = vmatprep.subr.mxu0 0.0
  %165 = vmatpush1.msra.mxu0 0.0
  %166 = vmatprep.subr.mxu0 0.0
  %167 = vmatpush1.msra.mxu0 0.0
  %168 = vmatprep.subr.mxu0 0.0
  %169 = vmatpush1.msra.mxu0 0.0
  %170 = vmatprep.subr.mxu0 0.0
  %171 = vmatpush1.msra.mxu0 0.0
  %172 = vmatprep.subr.mxu0 0.0
  %173 = vmatpush1.msra.mxu0 0.0
  %174 = vmatprep.subr.mxu0 0.0
  %175 = vmatpush1.msra.mxu0 0.0
  %176 = vmatprep.subr.mxu0 0.0
  %177 = vmatpush1.msra.mxu0 0.0
  %178 = vmatprep.subr.mxu0 0.0
  %179 = vmatpush1.msra.mxu0 0.0
  %180 = vmatprep.subr.mxu0 0.0
  %181 = vmatpush1.msra.mxu0 0.0
  %182 = vmatprep.subr.mxu0 0.0
  %183 = vmatpush1.msra.mxu0 0.0
  %184 = vmatprep.subr.mxu0 0.0
  %185 = vmatpush1.msra.mxu0 0.0
  %186 = vmatprep.subr.mxu0 0.0
  %187 = vmatpush1.msra.mxu0 0.0
  %188 = vmatprep.subr.mxu0 0.0
  %189 = vmatpush1.msra.mxu0 0.0
  %190 = vmatprep.subr.mxu0 0.0
  %191 = vmatpush1.msra.mxu0 0.0
  %192 = vmatprep.subr.mxu0 0.0
  %193 = vmatpush1.msra.mxu0 0.0
  %194 = vmatprep.subr.mxu0 0.0
  %195 = vmatpush1.msra.mxu0 0.0
  %196 = vmatprep.mubr.f32.mxu0 0.0
  %197 = vmatmul.mubr.f32.gmra.mrb[0].mxu0 %v130
  %v198 = vpop.f32.mrb[0].mxu0
  %v199 = vadd.f32 %v126, %v198
  %v200 = vpop.f32.mrb[0].mxu0
  %201 = vdwg.mxu0
  %v202 = vmax.f32 %v199, 0.0
  %v203 = vld [vmem:[%s5] sm:$0xff]
  %v204 = vld [vmem:[%s5 + $0x8] sm:$0xff]
  %v205 = vld [vmem:[%s5 + $0x10] sm:$0xff]
  %v206 = vld [vmem:[%s5 + $0x18] sm:$0xff]
  %v207 = vld [vmem:[%s5 + $0x20] sm:$0xff]
  %v208 = vld [vmem:[%s5 + $0x28] sm:$0xff]
  %v209 = vld [vmem:[%s5 + $0x30] sm:$0xff]
  %v210 = vld [vmem:[%s5 + $0x38] sm:$0xff]
  %v211 = vld [vmem:[%s6] sm:$0x1]
  %v213 = vlaneseq
  %v214 = vshrl.u32 %v213, 7
  %v215 = vsub.s32 0, %v214
  %v216 = vrot.slane %v211, %v215
  %v219 = vsel %vm128, %v202, 0
  %221 = vmatprep.subr.mxu0 0.0
  %222 = vmatpush1.msra.mxu0 %v203
  %223 = vmatprep.subr.mxu0 0.0
  %224 = vmatpush1.msra.mxu0 %v204
  %225 = vmatprep.subr.mxu0 0.0
  %226 = vmatpush1.msra.mxu0 %v205
  %227 = vmatprep.subr.mxu0 0.0
  %228 = vmatpush1.msra.mxu0 %v206
  %229 = vmatprep.subr.mxu0 0.0
  %230 = vmatpush1.msra.mxu0 %v207
  %231 = vmatprep.subr.mxu0 0.0
  %232 = vmatpush1.msra.mxu0 %v208
  %233 = vmatprep.subr.mxu0 0.0
  %234 = vmatpush1.msra.mxu0 %v209
  %235 = vmatprep.subr.mxu0 0.0
  %236 = vmatpush1.msra.mxu0 %v210
  %237 = vmatprep.subr.mxu0 0.0
  %238 = vmatpush1.msra.mxu0 0.0
  %239 = vmatprep.subr.mxu0 0.0
  %240 = vmatpush1.msra.mxu0 0.0
  %241 = vmatprep.subr.mxu0 0.0
  %242 = vmatpush1.msra.mxu0 0.0
  %243 = vmatprep.subr.mxu0 0.0
  %244 = vmatpush1.msra.mxu0 0.0
  %245 = vmatprep.subr.mxu0 0.0
  %246 = vmatpush1.msra.mxu0 0.0
  %247 = vmatprep.subr.mxu0 0.0
  %248 = vmatpush1.msra.mxu0 0.0
  %249 = vmatprep.subr.mxu0 0.0
  %250 = vmatpush1.msra.mxu0 0.0
  %251 = vmatprep.subr.mxu0 0.0
  %252 = vmatpush1.msra.mxu0 0.0
  %253 = vmatprep.subr.mxu0 0.0
  %254 = vmatpush1.msra.mxu0 0.0
  %255 = vmatprep.subr.mxu0 0.0
  %256 = vmatpush1.msra.mxu0 0.0
  %257 = vmatprep.subr.mxu0 0.0
  %258 = vmatpush1.msra.mxu0 0.0
  %259 = vmatprep.subr.mxu0 0.0
  %260 = vmatpush1.msra.mxu0 0.0
  %261 = vmatprep.subr.mxu0 0.0
  %262 = vmatpush1.msra.mxu0 0.0
  %263 = vmatprep.subr.mxu0 0.0
  %264 = vmatpush1.msra.mxu0 0.0
  %265 = vmatprep.subr.mxu0 0.0
  %266 = vmatpush1.msra.mxu0 0.0
  %267 = vmatprep.subr.mxu0 0.0
  %268 = vmatpush1.msra.mxu0 0.0
  %269 = vmatprep.subr.mxu0 0.0
  %270 = vmatpush1.msra.mxu0 0.0
  %271 = vmatprep.subr.mxu0 0.0
  %272 = vmatpush1.msra.mxu0 0.0
  %273 = vmatprep.subr.mxu0 0.0
  %274 = vmatpush1.msra.mxu0 0.0
  %275 = vmatprep.subr.mxu0 0.0
  %276 = vmatpush1.msra.mxu0 0.0
  %277 = vmatprep.subr.mxu0 0.0
  %278 = vmatpush1.msra.mxu0 0.0
  %279 = vmatprep.subr.mxu0 0.0
  %280 = vmatpush1.msra.mxu0 0.0
  %281 = vmatprep.subr.mxu0 0.0
  %282 = vmatpush1.msra.mxu0 0.0
  %283 = vmatprep.subr.mxu0 0.0
  %284 = vmatpush1.msra.mxu0 0.0
  %285 = vmatprep.mubr.f32.mxu0 0.0
  %286 = vmatmul.mubr.f32.gmra.mrb[0].mxu0 %v219
  %v287 = vpop.f32.mrb[0].mxu0
  %v288 = vadd.f32 %v216, %v287
  %v289 = vpop.f32.mrb[0].mxu0
  %290 = vdwg.mxu0
  %291 = vst [vmem:[%s7] sm:$0xff] %v288
  // Predicated region
  $region30: #{qr_forward.1} parent=0 // pred_check
    _
  $region31: #{qr_forward.1} parent=0 // pred_check_branch
    %293 = sbr.rel (0) target = $region33
  $region32: #{qr_forward.1} parent=0 // pred_region
    _
  $region33: #{qr_forward.1} parent=0 // pred_fallthru
    _
  // Predicated region
  $region34: #{qr_forward.1} parent=0 // pred_check
    _
  $region35: #{qr_forward.1} parent=0 // pred_check_branch
    %295 = sbr.rel (0) target = $region37
  $region36: #{qr_forward.1} parent=0 // pred_region
    _
  $region37: #{qr_forward.1} parent=0 // pred_fallthru
    _

</llo_original>
